<compile_context>
chip_gen: v5e
topology: v5e:2x2
jax: 0.10.0
libtpu: 0.0.40
codegen_flags: <defaults>
</compile_context>

<pallas_src>
import math

import jax
import jax.numpy as jnp
from jax.experimental import pallas as pl
from jax.experimental.pallas import tpu as pltpu


# ---------------------------------------------------------------------------
# Kernel
# ---------------------------------------------------------------------------
def _generator_kernel(x_ref, w_ref, b_ref, o_ref):
    # x_ref : (tm, F)      f32  -- full lane-aligned row tile (incl. passthrough cols)
    # w_ref : (F, vocab)   bf16 -- VMEM-resident, single-buffered; rows [0:3) are zero
    # b_ref : (1, vocab)   f32  -- VMEM-resident, single-buffered
    # o_ref : (tm, vocab)  f32  -- lane-dense log-prob tile (written at lane 0)
    h = x_ref[...].astype(jnp.bfloat16)                    # cast in-registers (VPU, free)
    logits = jnp.dot(h, w_ref[...],
                     preferred_element_type=jnp.float32) + b_ref[...]

    # Numerically stable log-softmax along the vocab axis (f32 throughout).
    m = jnp.max(logits, axis=-1, keepdims=True)
    shifted = logits - m
    lse = jnp.log(jnp.sum(jnp.exp(shifted), axis=-1, keepdims=True))
    o_ref[...] = (shifted - lse).astype(o_ref.dtype)


# ---------------------------------------------------------------------------
# Tiling / VMEM derivation
# ---------------------------------------------------------------------------
def _round_up(n, m):
    return (n + m - 1) // m * m


def _round_down(n, m):
    return max(m, (n // m) * m)


def _physical_vmem_bytes():
    try:
        return int(pltpu.get_tpu_info().vmem_capacity_bytes)
    except Exception:
        return 64 * 1024 * 1024  # conservative fallback: v7x per-core VMEM


def _choose_tiling(N, F, vocab):
    cap = _physical_vmem_bytes()
    vmem_limit = min(int(cap * 0.85), 110 * 1024 * 1024)   # v6e/v5e ~108 MiB, v7x ~54 MiB
    tile_budget = int(cap * 0.70)

    # Resident (single-buffered) operands, padded to their lane/sublane tiles.
    vocab_p = _round_up(vocab, 128)
    resident = 2 * _round_up(F, 16) * vocab_p + 4 * 8 * vocab_p   # bf16 weight + f32 bias
    avail = max(tile_budget - resident, 2 * 1024 * 1024)

    # Double-buffered f32 input row tile (F wide) + f32 output tile (vocab wide), per row.
    per_row = 4 * 2 * (_round_up(F, 128) + vocab_p)
    tm = max(8, avail // per_row)
    tm = min(tm, 1024, _round_up(N, 8))

    # Keep at least 2 grid steps so both v7x TensorCores get work on small N.
    while tm > 8 and pl.cdiv(N, tm) < 2:
        tm //= 2

    # Alignment: multiples of 256 fill the MXU M dim when possible, else multiples of 8.
    tm = _round_down(tm, 256) if tm >= 256 else _round_down(tm, 8)
    return int(tm), int(vmem_limit)


# ---------------------------------------------------------------------------
# Wrapper
# ---------------------------------------------------------------------------
def generator_forward(x, weight, bias, *, n_pass=3):
    """x: (B, S, n_pass + d_model) f32; weight: (vocab, d_model) (nn.Linear layout); bias: (vocab,)."""
    B, S, F = x.shape
    vocab, d_model = weight.shape
    assert F == n_pass + d_model, (F, n_pass, d_model)
    N = B * S

    # Transpose + zero-pad the weight with n_pass leading rows so the kernel can feed
    # the full, lane-aligned x row tile straight to the MXU (no in-kernel column slice):
    # dot(x_full, w_pad) == dot(x[:, n_pass:], W^T).  Cast to bf16 for the MXU.
    w_k = jnp.zeros((F, vocab), dtype=jnp.bfloat16)
    w_k = w_k.at[n_pass:, :].set(weight.T.astype(jnp.bfloat16))
    b_k = bias.reshape(1, vocab).astype(jnp.float32)
    x2 = x.reshape(N, F)

    tm, vmem_limit = _choose_tiling(N, F, vocab)
    grid = (pl.cdiv(N, tm),)

    cost = pl.CostEstimate(
        flops=2 * N * F * vocab,
        transcendentals=N * (vocab + 1),
        bytes_accessed=(N * F * 4) + (F * vocab * 2) + (vocab * 4) + (N * vocab * 4),
    )

    logp = pl.pallas_call(
        _generator_kernel,
        out_shape=jax.ShapeDtypeStruct((N, vocab), jnp.float32),
        grid=grid,
        in_specs=[
            # streamed row tiles (double-buffered by default)
            pl.BlockSpec((tm, F), lambda i: (i, 0)),
            # resident weight / bias: constant index_map -> never re-fetched, single buffer
            pl.BlockSpec((F, vocab), lambda i: (0, 0), pipeline_mode=pl.Buffered(1)),
            pl.BlockSpec((1, vocab), lambda i: (0, 0), pipeline_mode=pl.Buffered(1)),
        ],
        out_specs=pl.BlockSpec((tm, vocab), lambda i: (i, 0)),   # lane-dense at column 0
        compiler_params=pltpu.CompilerParams(
            dimension_semantics=("parallel",),
            vmem_limit_bytes=vmem_limit,
        ),
        cost_estimate=cost,
    )(x2, w_k, b_k)

    logp = logp.reshape(B, S, vocab)
    # Final concat with the passthrough columns is layout plumbing done outside the kernel.
    return jnp.concatenate((x[:, :, :n_pass], logp), axis=2)


# ---------------------------------------------------------------------------
# Pure-JAX reference (f32 end to end)
# ---------------------------------------------------------------------------
def generator_reference(x, weight, bias, n_pass=3):
    xeg = x[:, :, n_pass:]
    logits = jnp.einsum("bsd,vd->bsv", xeg, weight) + bias
    logp = jax.nn.log_softmax(logits, axis=-1)
    return jnp.concatenate((x[:, :, :n_pass], logp), axis=2)


# ---------------------------------------------------------------------------
# Test
# ---------------------------------------------------------------------------
if __name__ == "__main__":
    B, S = 2, 8
    d_model = 32
    vocab = 16
    n_pass = 3

    key = jax.random.PRNGKey(0)
    k_x, k_w, k_b = jax.random.split(key, 3)

    x = jax.random.normal(k_x, (B, S, n_pass + d_model), dtype=jnp.float32)
    # nn.Linear(d_model, vocab): weight (vocab, d_model), bias (vocab,).
    w = jax.random.normal(k_w, (vocab, d_model), dtype=jnp.float32) * (1.0 / math.sqrt(d_model))
    b = jax.random.normal(k_b, (vocab,), dtype=jnp.float32) * 0.01

    out = generator_forward(x, w, b, n_pass=n_pass)
    out = jax.block_until_ready(out)

    ref = generator_reference(x, w, b, n_pass=n_pass)
    assert out.shape == (B, S, n_pass + vocab), out.shape
    assert bool(jnp.all(jnp.isfinite(out)))
    # Passthrough columns are copied exactly.
    assert jnp.array_equal(out[:, :, :n_pass], x[:, :, :n_pass])
    # bf16 MXU operands -> relax tolerance vs. the f32 reference.
    max_err = float(jnp.max(jnp.abs(out - ref)))
    assert jnp.allclose(out, ref, atol=5e-2, rtol=5e-2), f"mismatch vs reference (max err {max_err})"

    print("KERNEL_OK")
</pallas_src>

<mosaic_0001>
module attributes {stable_mosaic.version = 11 : i64} {
  func.func @_generator_kernel(%arg0: i32, %arg1: memref<8x35xf32, #tpu.memory_space<vmem>>, %arg2: memref<35x16xbf16, #tpu.memory_space<vmem>>, %arg3: memref<1x16xf32, #tpu.memory_space<vmem>>, %arg4: memref<8x16xf32, #tpu.memory_space<vmem>>) attributes {dimension_semantics = [#tpu.dimension_semantics<parallel>], iteration_bounds = array<i64: 2>, scalar_prefetch = 0 : i64, scratch_operands = 0 : i64, tpu.core_type = #tpu.core_type<tc>, window_params = [{transform_indices = @transform_0, window_bounds = array<i64: 8, 35>}, {pipeline_mode = #tpu.pipeline_mode<synchronous>, transform_indices = @transform_1, window_bounds = array<i64: 35, 16>}, {pipeline_mode = #tpu.pipeline_mode<synchronous>, transform_indices = @transform_2, window_bounds = array<i64: 1, 16>}, {transform_indices = @transform_3, window_bounds = array<i64: 8, 16>}]} {
    %c0 = arith.constant 0 : index
    %c0_0 = arith.constant 0 : index
    %0 = vector.load %arg1[%c0, %c0_0] : memref<8x35xf32, #tpu.memory_space<vmem>>, vector<8x35xf32>
    %1 = arith.truncf %0 : vector<8x35xf32> to vector<8x35xbf16>
    %c0_1 = arith.constant 0 : index
    %c0_2 = arith.constant 0 : index
    %2 = vector.load %arg2[%c0_1, %c0_2] : memref<35x16xbf16, #tpu.memory_space<vmem>>, vector<35x16xbf16>
    %cst = arith.constant dense<0.000000e+00> : vector<8x16xf32>
    %3 = tpu.matmul %1, %2, %cst {dimension_numbers = #tpu.dot_dimension_numbers<[1], [0], [0], [1], [0, 0, 1, 1], [], []>} : vector<8x35xbf16>, vector<35x16xbf16>, vector<8x16xf32> -> vector<8x16xf32>
    %c0_3 = arith.constant 0 : index
    %c0_4 = arith.constant 0 : index
    %4 = vector.load %arg3[%c0_3, %c0_4] : memref<1x16xf32, #tpu.memory_space<vmem>>, vector<1x16xf32>
    %5 = vector.broadcast %4 : vector<1x16xf32> to vector<8x16xf32>
    %6 = arith.addf %3, %5 : vector<8x16xf32>
    %cst_5 = arith.constant dense<0xFF800000> : vector<8xf32>
    %7 = vector.multi_reduction <maximumf>, %6, %cst_5 [1] : vector<8x16xf32> to vector<8xf32>
    %8 = vector.shape_cast %7 : vector<8xf32> to vector<8x1xf32>
    %9 = vector.broadcast %8 : vector<8x1xf32> to vector<8x16xf32>
    %10 = arith.subf %6, %9 : vector<8x16xf32>
    %11 = math.exp %10 : vector<8x16xf32>
    %cst_6 = arith.constant dense<0.000000e+00> : vector<8xf32>
    %12 = vector.multi_reduction <add>, %11, %cst_6 [1] : vector<8x16xf32> to vector<8xf32>
    %13 = vector.shape_cast %12 : vector<8xf32> to vector<8x1xf32>
    %14 = math.log %13 : vector<8x1xf32>
    %15 = vector.broadcast %14 : vector<8x1xf32> to vector<8x16xf32>
    %16 = arith.subf %10, %15 : vector<8x16xf32>
    %c0_7 = arith.constant 0 : index
    %c0_8 = arith.constant 0 : index
    %17 = vector.load %arg4[%c0_7, %c0_8] : memref<8x16xf32, #tpu.memory_space<vmem>>, vector<8x16xf32>
    tpu.vector_store %arg4[%c0_7, %c0_8], %16 {strides = array<i32>} : memref<8x16xf32, #tpu.memory_space<vmem>>, vector<8x16xf32>,
    return
  }
  func.func @transform_0(%arg0: i32) -> (i32, i32) {
    %c0_i32 = arith.constant 0 : i32
    %c0_i32_0 = arith.constant 0 : i32
    return %arg0, %c0_i32 : i32, i32
  }
  func.func @transform_1(%arg0: i32) -> (i32, i32) {
    %c0_i32 = arith.constant 0 : i32
    %c0_i32_0 = arith.constant 0 : i32
    %c0_i32_1 = arith.constant 0 : i32
    return %c0_i32, %c0_i32_0 : i32, i32
  }
  func.func @transform_2(%arg0: i32) -> (i32, i32) {
    %c0_i32 = arith.constant 0 : i32
    %c0_i32_0 = arith.constant 0 : i32
    %c0_i32_1 = arith.constant 0 : i32
    return %c0_i32, %c0_i32_0 : i32, i32
  }
  func.func @transform_3(%arg0: i32) -> (i32, i32) {
    %c0_i32 = arith.constant 0 : i32
    %c0_i32_0 = arith.constant 0 : i32
    return %arg0, %c0_i32 : i32, i32
  }
}

</mosaic_0001>

<llo_original>
// kernel: tpu_custom_call.1
$region0: #{tpu_custom_call.1}
  #allocation0 [shape = 'u32[]', space=smem, size = 0x4, offset = 0x4, fixed_abs, tag = 'smem constant byte address 0x4 - core index']
  #allocation1 [shape = 'u32[72,128]{1,0:T(1,128)}', space=vmem, size = 0x9000, scoped, tag = 'internal scratch']
  %s0 = inlined_call_operand.vmem [shape: f32[16,35], index: 0, kind: input, shape index: {}]
  %s1 = inlined_call_operand.vmem [shape: bf16[35,16], index: 1, kind: input, shape index: {}]
  %s2 = inlined_call_operand.vmem [shape: f32[1,16], index: 2, kind: input, shape index: {}]
  %s3 = inlined_call_operand.hbm [shape: f32[16,16], index: 3, kind: output, shape index: {}]
  %s4 = sld [smem:[#allocation0]]
  $region45: #{tpu_custom_call.1} parent=0
    _
  %s6 = ssub.s32 1, %s4
  %s7 = scalar_select 0, %s6, %s4
  $region1: #{tpu_custom_call.1} parent=0
    #allocation2 [shape = 'u8[8192]{0}', space=vmem, size = 0x2000, scoped, tag = 'output window, operand 0']
    #allocation3 [shape = 's32[2]{0}', space=sflag, size = 0x8, scoped, tag = 'scoped memory for tpu_custom_call.1']
    %8 = vsyncpa [#allocation3], 0
    %s9 = scalar_lea.sflag [#allocation3], 1
    %10 = vsyncpa %s9, 0
    loop: start=0, step=1, limit=4
    $region2: #{tpu_custom_call.1} parent=1 // loop_pre_header
      _
    $region3: #{tpu_custom_call.1} parent=1 // loop_header
      %s12 = sphi 0, %s16
      %p13 = scmp.ge.s32.totalorder %s12, 4
      %s22 = sphi 0, %s24
      %s25 = sphi 0, %s22
      %s26 = sphi 0, %s25
      %s42 = sphi 0, %s26
      %s46 = sphi 0, %s46
      %s48 = sphi 0, %s46
      %s49 = sphi 0, %s48
      %s63 = sphi 0, %s49
      %s67 = sphi 0, %s67
      %s69 = sphi 0, %s67
      %s70 = sphi 0, %s69
      %s84 = sphi 0, %s70
      %s90 = sphi 0, %s92
      %s93 = sphi 0, %s90
      %s94 = sphi 0, %s93
      %s110 = sphi 0, %s94
    $region4: #{tpu_custom_call.1} parent=1 // loop_header_branch
      %15 = sbr.rel (%p13) target = $region8
    $region5: #{tpu_custom_call.1} parent=1 // loop_body
      %s17 = ssub.s32 %s12, 1
      %s18 = ssub.s32 %s12, 2
      %s19 = sadd.s32 %s12, 1
      %s20 = ssub.s32 %s12, %s19
      %p21 = scmp.eq.s32.totalorder %s20, 0
      %s23 = sadd.s32 %s22, 1
      %s24 = scalar_select %p21, %s22, %s23
      %p27 = pneg %p21
      %p28 = scmp.eq.s32.totalorder %s12, 1
      %p29 = por %p27, %p28
      %p30 = scmp.ne.s32.totalorder %s22, %s25
      %p31 = scmp.eq.s32.totalorder %s12, 0
      %p32 = por %p30, %p31
      %p33 = scmp.ne.s32.totalorder %s22, %s25
      %p34 = scmp.eq.s32.totalorder %s17, 1
      %p35 = por %p33, %p34
      %p36 = scmp.ne.s32.totalorder %s25, %s26
      %p37 = scmp.eq.s32.totalorder %s17, 0
      %p38 = por %p36, %p37
      %p39 = scmp.ne.s32.totalorder %s25, %s26
      %p40 = scmp.eq.s32.totalorder %s18, 1
      %p41 = por %p39, %p40
      %p43 = scmp.ne.s32.totalorder %s26, %s42
      %p44 = scmp.eq.s32.totalorder %s18, 0
      %p45 = por %p43, %p44
      %s47 = sadd.s32 %s46, 1
      %p50 = scmp.eq.s32.totalorder %s12, 1
      %p51 = scmp.ne.s32.totalorder %s46, %s48
      %p52 = scmp.eq.s32.totalorder %s12, 0
      %p53 = por %p51, %p52
      %p54 = scmp.ne.s32.totalorder %s46, %s48
      %p55 = scmp.eq.s32.totalorder %s17, 1
      %p56 = por %p54, %p55
      %p57 = scmp.ne.s32.totalorder %s48, %s49
      %p58 = scmp.eq.s32.totalorder %s17, 0
      %p59 = por %p57, %p58
      %p60 = scmp.ne.s32.totalorder %s48, %s49
      %p61 = scmp.eq.s32.totalorder %s18, 1
      %p62 = por %p60, %p61
      %p64 = scmp.ne.s32.totalorder %s49, %s63
      %p65 = scmp.eq.s32.totalorder %s18, 0
      %p66 = por %p64, %p65
      %s68 = sadd.s32 %s67, 1
      %p71 = scmp.eq.s32.totalorder %s12, 1
      %p72 = scmp.ne.s32.totalorder %s67, %s69
      %p73 = scmp.eq.s32.totalorder %s12, 0
      %p74 = por %p72, %p73
      %p75 = scmp.ne.s32.totalorder %s67, %s69
      %p76 = scmp.eq.s32.totalorder %s17, 1
      %p77 = por %p75, %p76
      %p78 = scmp.ne.s32.totalorder %s69, %s70
      %p79 = scmp.eq.s32.totalorder %s17, 0
      %p80 = por %p78, %p79
      %p81 = scmp.ne.s32.totalorder %s69, %s70
      %p82 = scmp.eq.s32.totalorder %s18, 1
      %p83 = por %p81, %p82
      %p85 = scmp.ne.s32.totalorder %s70, %s84
      %p86 = scmp.eq.s32.totalorder %s18, 0
      %p87 = por %p85, %p86
      %s88 = ssub.s32 %s12, %s19
      %p89 = scmp.eq.s32.totalorder %s88, 0
      %s91 = sadd.s32 %s90, 1
      %s92 = scalar_select %p89, %s90, %s91
      %p95 = pneg %p89
      %p96 = scmp.eq.s32.totalorder %s12, 1
      %p97 = por %p95, %p96
      %p98 = scmp.ne.s32.totalorder %s90, %s93
      %p99 = scmp.eq.s32.totalorder %s12, 0
      %p100 = por %p98, %p99
      %p101 = scmp.ne.s32.totalorder %s90, %s93
      %p102 = scmp.eq.s32.totalorder %s17, 1
      %p103 = por %p101, %p102
      %p104 = scmp.ne.s32.totalorder %s93, %s94
      %p105 = scmp.eq.s32.totalorder %s17, 0
      %p106 = por %p104, %p105
      %p107 = scmp.ne.s32.totalorder %s93, %s94
      %p108 = scmp.eq.s32.totalorder %s18, 1
      %p109 = por %p107, %p108
      %p111 = scmp.ne.s32.totalorder %s94, %s110
      %p112 = scmp.eq.s32.totalorder %s18, 0
      %p113 = por %p111, %p112
      %p114 = scmp.le.s32.totalorder 1, %s12
      %p115 = scmp.lt.s32.totalorder %s12, 3
      %p116 = pnand %p114, %p115
      %p117 = pneg %p116
      // Predicated region
      $region9: #{tpu_custom_call.1} parent=5 // pred_check
        _
      $region10: #{tpu_custom_call.1} parent=5 // pred_check_branch
        %119 = sbr.rel (%p116) target = $region12
      $region11: #{tpu_custom_call.1} parent=5 // pred_region
        %s120 = ssub.s32 %s12, 1
        // Predicated region
        $region13: #{tpu_custom_call.1} parent=11 // pred_check
          %p121 = pneg %p59
        $region14: #{tpu_custom_call.1} parent=11 // pred_check_branch
          %123 = sbr.rel (%p121) target = $region16
        $region15: #{tpu_custom_call.1} parent=11 // pred_region
          _
        $region16: #{tpu_custom_call.1} parent=11 // pred_fallthru
          _
        // Predicated region
        $region17: #{tpu_custom_call.1} parent=11 // pred_check
          %p124 = pneg %p80
        $region18: #{tpu_custom_call.1} parent=11 // pred_check_branch
          %126 = sbr.rel (%p124) target = $region20
        $region19: #{tpu_custom_call.1} parent=11 // pred_region
          _
        $region20: #{tpu_custom_call.1} parent=11 // pred_fallthru
          _
      $region12: #{tpu_custom_call.1} parent=5 // pred_fallthru
        _
      %p127 = scmp.lt.s32.totalorder %s12, 2
      // Predicated region
      $region21: #{tpu_custom_call.1} parent=5 // pred_check
        %p128 = pneg %p127
      $region22: #{tpu_custom_call.1} parent=5 // pred_check_branch
        %130 = sbr.rel (%p128) target = $region24
      $region23: #{tpu_custom_call.1} parent=5 // pred_region
        // Predicated region
        $region25: #{tpu_custom_call.1} parent=23 // pred_check
          %p131 = pneg %p32
        $region26: #{tpu_custom_call.1} parent=23 // pred_check_branch
          %133 = sbr.rel (%p131) target = $region28
        $region27: #{tpu_custom_call.1} parent=23 // pred_region
          %p134 = scmp.lt.s32.totalorder %s12, 1
          %s135 = scalar_select %p134, %s12, 1
          %s136 = smul.addr %s135, 8
          %s137 = scalar_lea.vmem %s0, %s136
        $region28: #{tpu_custom_call.1} parent=23 // pred_fallthru
          _
      $region24: #{tpu_custom_call.1} parent=5 // pred_fallthru
        _
      %p138 = scmp.le.s32.totalorder 1, %s12
      %p139 = scmp.lt.s32.totalorder %s12, 3
      %p140 = pnand %p138, %p139
      %p141 = pneg %p140
      // Predicated region
      $region29: #{tpu_custom_call.1} parent=5 // pred_check
        _
      $region30: #{tpu_custom_call.1} parent=5 // pred_check_branch
        %143 = sbr.rel (%p140) target = $region32
      $region31: #{tpu_custom_call.1} parent=5 // pred_region
        %s144 = ssub.s32 %s12, 1
        %p145 = scmp.lt.s32.totalorder %s17, 1
        %s146 = scalar_select %p145, %s17, 1
        %s147 = smul.addr %s146, 8
        %s148 = scalar_lea.vmem %s0, %s147
        %p149 = pneg %p38
        %p150 = pneg %p35
        %p151 = pneg %p59
        %p152 = pneg %p56
        %p153 = pneg %p80
        %p154 = pneg %p77
        %p155 = pneg %p106
        %p156 = pneg %p103
        %s157 = sand.u32 %s93, 1
        %s158 = scalar_lea.sflag [#allocation3], %s157
        %s159 = sand.u32 %s93, 1
        %s160 = smul.addr %s159, 8
        %s161 = scalar_lea.vmem [#allocation2], %s160
        %p162 = scmp.lt.s32.totalorder %s17, 1
        %s163 = scalar_select %p162, %s17, 1
        %s164 = smul.addr %s163, 8
        %s165 = scalar_lea.vmem %s0, %s164
        %v167 = vld [vmem:[%s165] sm:$0xff]
        %v168 = vpack.c.bf16 %v167, %v167
        %v169 = vld [vmem:[%s1] sm:$0xf]
        %v170 = vld [vmem:[%s1 + $0x4] sm:$0xf]
        %v171 = vld [vmem:[%s1 + $0x8] sm:$0xf]
        %v172 = vld [vmem:[%s1 + $0xc] sm:$0xf]
        %v173 = vld [vmem:[%s1 + $0x10] sm:$0x3]
        %v174 = vld [vmem:[%s2] sm:$0x1]
        %v176 = vperm.slane %v174, 0
        %v183 = vunpack.c.l.b16 %v169
        %v184 = vunpack.c.l.b16 %v170
        %v185 = vunpack.c.l.b16 %v171
        %v186 = vunpack.c.l.b16 %v172
        %v187 = vunpack.c.l.b16 %v173
        %v188 = vpack.c.b16 %v184, %v183
        %v189 = vpack.c.b16 %v186, %v185
        %v190 = vpack.c.b16 %v187, %v187
        %vm193 = vcmask 285696
        %v195 = vsel %vm193, %v168, 0
        %vm197 = vcmask 1040384
        %vm198 = vcmask 1041408
        %v199 = vsel %vm197, 4294967295, 65535
        %v200 = vsel %vm198, %v199, 0
        %v202 = vand.u32 %v190, %v200
        %204 = vmatpush.bf16.msra.mxu0 0
        %205 = vmatpush.bf16.msra.mxu0 0
        %206 = vmatpush.bf16.msra.mxu0 0
        %207 = vmatpush.bf16.msra.mxu0 0
        %208 = vmatpush.bf16.msra.mxu0 0
        %209 = vmatpush.bf16.msra.mxu0 %v202
        %210 = vmatpush.bf16.msra.mxu0 %v189
        %211 = vmatpush.bf16.msra.mxu0 %v188
        %212 = vmatmul.bf16.gmra.mxu0 %v195
        %v213 = vpop.f32.mrf.mxu0
        %v214 = vadd.f32 %v176, %v213
        %v215 = vpop.f32.mrf.mxu0
        %216 = vdwg.mxu0
        %vm217 = vcmask 130048
        %v218 = vsel %vm217, %v214, -inf
        %219 = vmax.xlane.f32.xlu0 %v218
        %v220 = vpop.xlane.xlu0 %219
        %v221 = vsub.f32 %v214, %v220
        %v222 = vmul.f32 %v221, 1.442695
        %v223 = vpow.pop %v222
        %v224 = vsel %vm217, %v223, 0.0
        %225 = vadd.xlane.f32.xlu0 %v224
        %v226 = vpop.xlane.xlu0 %225
        %v227 = vlog2.pop %v226
        %v228 = vmul.f32 %v227, 0.6931472
        %v229 = vsub.f32 %v221, %v228
        %230 = vst.msk [vmem:[%s161] sm:$0xff] %vm217, %v229
        %s231 = sand.u32 %s93, 1
        %s232 = scalar_lea.sflag [#allocation3], %s231
        %s233 = sand.u32 %s93, 1
        %s234 = smul.addr %s233, 8
        %s235 = scalar_lea.vmem [#allocation2], %s234
        // Predicated region
        $region33: #{tpu_custom_call.1} parent=31 // pred_check
          %p236 = pneg %p103
        $region34: #{tpu_custom_call.1} parent=31 // pred_check_branch
          %238 = sbr.rel (%p236) target = $region36
        $region35: #{tpu_custom_call.1} parent=31 // pred_region
          %240 = vsyncadd %s232, 0
          %s241 = smul.addr %s17, 8
          %s242 = scalar_lea.hbm %s3, %s241
          %s244 = sshll.u32 %s235, 4
          %s245 = int_to_ptr.vmem [resolvable:$true] %s244
          %s246 = sshll.u32 %s242, 4
          %s247 = int_to_ptr.hbm [resolvable:$true] %s246
          %249 = dma.vmem_to_hbm [thread:$0]  %s245, 128, %s247, %s232
        $region36: #{tpu_custom_call.1} parent=31 // pred_fallthru
          _
      $region32: #{tpu_custom_call.1} parent=5 // pred_fallthru
        _
      %p250 = scmp.le.s32.totalorder 2, %s12
      // Predicated region
      $region37: #{tpu_custom_call.1} parent=5 // pred_check
        %p251 = pneg %p250
      $region38: #{tpu_custom_call.1} parent=5 // pred_check_branch
        %253 = sbr.rel (%p251) target = $region40
      $region39: #{tpu_custom_call.1} parent=5 // pred_region
        %s254 = ssub.s32 %s12, 2
        // Predicated region
        $region41: #{tpu_custom_call.1} parent=39 // pred_check
          %p255 = pneg %p109
        $region42: #{tpu_custom_call.1} parent=39 // pred_check_branch
          %257 = sbr.rel (%p255) target = $region44
        $region43: #{tpu_custom_call.1} parent=39 // pred_region
          %s258 = sand.u32 %s94, 1
          %s259 = scalar_lea.sflag [#allocation3], %s258
          %s260 = sand.u32 %s94, 1
          %s261 = smul.addr %s260, 8
          %s262 = scalar_lea.vmem [#allocation2], %s261
          %264 = dma.done %s259, 128
        $region44: #{tpu_custom_call.1} parent=39 // pred_fallthru
          _
      $region40: #{tpu_custom_call.1} parent=5 // pred_fallthru
        _
    $region6: #{tpu_custom_call.1} parent=1 // loop_footer
      %s16 = sadd.s32 1, %s12
    $region7: #{tpu_custom_call.1} parent=1 // loop_footer_branch
      %11 = sbr.rel target = $region3
    $region8: #{tpu_custom_call.1} parent=1 // loop_exit
      _
    %265 = vsyncpa [#allocation3], 1
    %s266 = scalar_lea.sflag [#allocation3], 1
    %267 = vsyncpa %s266, 1

</llo_original>
